<compile_context>
chip_gen: v7x
topology: tpu7x:2x2x1
jax: 0.10.0
libtpu: 0.0.40
codegen_flags: <defaults>
</compile_context>

<pallas_src>
import math

import jax
import jax.numpy as jnp
from jax.experimental import pallas as pl
from jax.experimental.pallas import tpu as pltpu

HIDDEN_UNITS = 384            # fc1 output
HIDDEN2 = HIDDEN_UNITS // 2   # fc2 output (192)
HIDDEN2_PAD = 256             # lane-aligned fc2 output (zero-padded)
HEAD_PAD = 128                # lane-dense head matmul width (3 real + 125 zero)
OUT_STORE = 8                 # narrow HBM output width (3 real + 5 zero lanes)

POWER_ACTION_BOUND = 15.0
BEACON_ACTION_BOUND = 10.0
MCS_ACTION_BOUND = 7.5


def _round_up(x, m):
    return ((x + m - 1) // m) * m


def actor_kernel(x_ref, w1_ref, b1_ref, w2_ref, b2_ref, wh_ref, bh_ref,
                 scale_ref, out_ref):
    # fc1 + relu: in-kernel f32 -> compute-dtype cast (hidden under the MXU),
    # MXU matmul with f32 accumulation, bias/relu in f32 on the VPU.
    x = x_ref[...].astype(w1_ref.dtype)
    h1 = jnp.dot(x, w1_ref[...], preferred_element_type=jnp.float32)
    h1 = jnp.maximum(h1 + b1_ref[...], 0.0)

    # fc2 + relu (columns 192..255 have zero W/b -> stay exactly zero).
    h2 = jnp.dot(h1.astype(w2_ref.dtype), w2_ref[...],
                 preferred_element_type=jnp.float32)
    h2 = jnp.maximum(h2 + b2_ref[...], 0.0)

    # Fused heads: lane-dense (128-wide) MXU matmul; epilogue + store are
    # narrowed to the 8 lanes that actually reach HBM (3 real, 5 zero).
    heads = jnp.dot(h2.astype(wh_ref.dtype), wh_ref[...],
                    preferred_element_type=jnp.float32)
    heads = heads[:, :OUT_STORE] + bh_ref[...]
    out_ref[...] = jnp.tanh(heads) * scale_ref[...]


def prepare_params(params, compute_dtype=jnp.bfloat16):
    """One-time layout prep (pad/cast). Call once, reuse across forwards."""
    h1, h2, h2p = HIDDEN_UNITS, HIDDEN2, HIDDEN2_PAD
    w1 = params["w1"].astype(compute_dtype)                                        # [F, 384]
    b1 = params["b1"].astype(jnp.float32)                                          # [1, 384]
    w2 = jnp.pad(params["w2"], ((0, 0), (0, h2p - h2))).astype(compute_dtype)      # [384, 256]
    b2 = jnp.pad(params["b2"], ((0, 0), (0, h2p - h2))).astype(jnp.float32)        # [1, 256]
    wh = jnp.pad(params["wh"],
                 ((0, h2p - h2), (0, HEAD_PAD - 3))).astype(compute_dtype)         # [256, 128]
    bh = jnp.pad(params["bh"], ((0, 0), (0, OUT_STORE - 3))).astype(jnp.float32)   # [1, 8]
    scale = jnp.zeros((1, OUT_STORE), jnp.float32).at[0, :3].set(
        jnp.array([POWER_ACTION_BOUND, BEACON_ACTION_BOUND, MCS_ACTION_BOUND],
                  jnp.float32))
    return {"w1": w1, "b1": b1, "w2": w2, "b2": b2, "wh": wh, "bh": bh,
            "scale": scale}


def ultra_explorative_actor_forward(x, prepped, *, block_b=2048,
                                    vmem_limit_bytes=32 * 1024 * 1024):
    """x: [B, F] float32 -> [B, 3] float32 (power_mean, beacon_mean, mcs_mean)."""
    B, F = x.shape
    H1, H2P, HP, OS = HIDDEN_UNITS, HIDDEN2_PAD, HEAD_PAD, OUT_STORE

    # Batch tiling: x stays f32 (no wrapper-side cast); pad only when needed.
    tb = min(block_b, _round_up(B, 8))
    b_pad = _round_up(B, tb)
    x_p = x if b_pad == B else jnp.pad(x, ((0, b_pad - B), (0, 0)))

    resident = lambda shape: pl.BlockSpec(shape, lambda i: (0, 0))  # VMEM-resident

    param_bytes = sum(int(v.size) * v.dtype.itemsize for v in prepped.values())
    cost = pl.CostEstimate(
        flops=2 * b_pad * (F * H1 + H1 * H2P + H2P * HP),
        transcendentals=b_pad * OS,
        bytes_accessed=b_pad * (F * x.dtype.itemsize + OS * 4) + param_bytes,
    )

    out = pl.pallas_call(
        actor_kernel,
        out_shape=jax.ShapeDtypeStruct((b_pad, OS), jnp.float32),
        grid=(b_pad // tb,),
        in_specs=[
            pl.BlockSpec((tb, F), lambda i: (i, 0)),    # x tile: streamed/pipelined
            resident((F, H1)),    resident((1, H1)),    # fc1
            resident((H1, H2P)),  resident((1, H2P)),   # fc2 (padded)
            resident((H2P, HP)),  resident((1, OS)),    # fused heads (padded) + bias
            resident((1, OS)),                          # per-head action bounds
        ],
        out_specs=pl.BlockSpec((tb, OS), lambda i: (i, 0)),
        compiler_params=pltpu.CompilerParams(
            dimension_semantics=("parallel",),          # shard batch tiles over TCs
            vmem_limit_bytes=vmem_limit_bytes),         # safe on v7x's 64 MiB VMEM
        cost_estimate=cost,
    )(x_p, prepped["w1"], prepped["b1"], prepped["w2"], prepped["b2"],
      prepped["wh"], prepped["bh"], prepped["scale"])

    return out[:B, :3]


def reference_forward(x, params):
    """Pure-JAX reference matching the PyTorch forward()."""
    h1 = jnp.maximum(x @ params["w1"] + params["b1"], 0.0)
    h2 = jnp.maximum(h1 @ params["w2"] + params["b2"], 0.0)
    heads = h2 @ params["wh"] + params["bh"]
    bounds = jnp.array([[POWER_ACTION_BOUND, BEACON_ACTION_BOUND,
                         MCS_ACTION_BOUND]], dtype=jnp.float32)
    return jnp.tanh(heads) * bounds


def init_params(feature_dim, key):
    """Deterministic init mirroring the PyTorch _init_weights scheme."""
    ks = jax.random.split(key, 8)
    h1, h2 = HIDDEN_UNITS, HIDDEN2

    def kaiming_uniform(k, fan_in, shape, a=0.2):
        gain = math.sqrt(2.0 / (1.0 + a * a))
        bound = gain * math.sqrt(3.0 / fan_in)
        return jax.random.uniform(k, shape, jnp.float32, -bound, bound)

    # fc1, fc2: kaiming_uniform(a=0.2) weights, uniform(-0.2, 0.2) biases
    w1 = kaiming_uniform(ks[0], feature_dim, (feature_dim, h1))
    b1 = jax.random.uniform(ks[1], (1, h1), jnp.float32, -0.2, 0.2)
    w2 = kaiming_uniform(ks[2], h1, (h1, h2))
    b2 = jax.random.uniform(ks[3], (1, h2), jnp.float32, -0.2, 0.2)

    # heads: uniform(-0.1, 0.1) weights, zero biases; packed as [h2, 3]
    w_power = jax.random.uniform(ks[4], (h2, 1), jnp.float32, -0.1, 0.1)
    w_beacon = jax.random.uniform(ks[5], (h2, 1), jnp.float32, -0.1, 0.1)
    w_mcs = jax.random.uniform(ks[6], (h2, 1), jnp.float32, -0.1, 0.1)
    wh = jnp.concatenate([w_power, w_beacon, w_mcs], axis=1)
    bh = jnp.zeros((1, 3), jnp.float32)

    return {"w1": w1, "b1": b1, "w2": w2, "b2": b2, "wh": wh, "bh": bh}


# TODO(synk): the stochastic sample() path (Normal sampling + log-probs) is not
# part of forward() and is left to the host-side JAX wrapper.

if __name__ == "__main__":
    key = jax.random.PRNGKey(0)
    k_param, k_x = jax.random.split(key)

    feature_dim = 16
    batch = 8
    params = init_params(feature_dim, k_param)
    x = jax.random.normal(k_x, (batch, feature_dim), dtype=jnp.float32)

    ref = reference_forward(x, params)
    fwd = jax.jit(ultra_explorative_actor_forward)

    # f32-operand path: should closely match the pure-JAX reference
    prepped_f32 = prepare_params(params, compute_dtype=jnp.float32)
    out_f32 = fwd(x, prepped_f32)
    jax.block_until_ready(out_f32)
    assert out_f32.shape == (batch, 3) and out_f32.dtype == jnp.float32
    assert bool(jnp.allclose(out_f32, ref, atol=1e-3, rtol=1e-3)), \
        float(jnp.max(jnp.abs(out_f32 - ref)))

    # default bf16-operand / f32-accumulation path (production config)
    prepped = prepare_params(params)   # bf16 weights, prepped once and reused
    out = fwd(x, prepped)
    jax.block_until_ready(out)
    assert out.shape == (batch, 3) and out.dtype == jnp.float32
    bounds = jnp.array([POWER_ACTION_BOUND, BEACON_ACTION_BOUND, MCS_ACTION_BOUND])
    assert bool(jnp.all(jnp.abs(out) <= bounds + 1e-5))
    assert bool(jnp.allclose(out, ref, atol=0.5)), \
        float(jnp.max(jnp.abs(out - ref)))

    print("KERNEL_OK")
</pallas_src>

<mosaic_0001>
module attributes {stable_mosaic.version = 11 : i64} {
  func.func @actor_kernel(%arg0: i32, %arg1: memref<8x16xf32, #tpu.memory_space<vmem>>, %arg2: memref<16x384xf32, #tpu.memory_space<vmem>>, %arg3: memref<1x384xf32, #tpu.memory_space<vmem>>, %arg4: memref<384x256xf32, #tpu.memory_space<vmem>>, %arg5: memref<1x256xf32, #tpu.memory_space<vmem>>, %arg6: memref<256x128xf32, #tpu.memory_space<vmem>>, %arg7: memref<1x8xf32, #tpu.memory_space<vmem>>, %arg8: memref<1x8xf32, #tpu.memory_space<vmem>>, %arg9: memref<8x8xf32, #tpu.memory_space<vmem>>) attributes {dimension_semantics = [#tpu.dimension_semantics<parallel>], iteration_bounds = array<i64: 1>, scalar_prefetch = 0 : i64, scratch_operands = 0 : i64, tpu.core_type = #tpu.core_type<tc>, window_params = [{transform_indices = @transform_0, window_bounds = array<i64: 8, 16>}, {pipeline_mode = #tpu.pipeline_mode<synchronous>, transform_indices = @transform_1, window_bounds = array<i64: 16, 384>}, {pipeline_mode = #tpu.pipeline_mode<synchronous>, transform_indices = @transform_2, window_bounds = array<i64: 1, 384>}, {pipeline_mode = #tpu.pipeline_mode<synchronous>, transform_indices = @transform_3, window_bounds = array<i64: 384, 256>}, {pipeline_mode = #tpu.pipeline_mode<synchronous>, transform_indices = @transform_4, window_bounds = array<i64: 1, 256>}, {pipeline_mode = #tpu.pipeline_mode<synchronous>, transform_indices = @transform_5, window_bounds = array<i64: 256, 128>}, {pipeline_mode = #tpu.pipeline_mode<synchronous>, transform_indices = @transform_6, window_bounds = array<i64: 1, 8>}, {pipeline_mode = #tpu.pipeline_mode<synchronous>, transform_indices = @transform_7, window_bounds = array<i64: 1, 8>}, {transform_indices = @transform_8, window_bounds = array<i64: 8, 8>}]} {
    %c0 = arith.constant 0 : index
    %c0_0 = arith.constant 0 : index
    %0 = vector.load %arg1[%c0, %c0_0] : memref<8x16xf32, #tpu.memory_space<vmem>>, vector<8x16xf32>
    %c0_1 = arith.constant 0 : index
    %c0_2 = arith.constant 0 : index
    %1 = vector.load %arg2[%c0_1, %c0_2] : memref<16x384xf32, #tpu.memory_space<vmem>>, vector<16x384xf32>
    %cst = arith.constant dense<0.000000e+00> : vector<8x384xf32>
    %2 = tpu.matmul %0, %1, %cst {dimension_numbers = #tpu.dot_dimension_numbers<[1], [0], [0], [1], [0, 0, 1, 1], [], []>} : vector<8x16xf32>, vector<16x384xf32>, vector<8x384xf32> -> vector<8x384xf32>
    %c0_3 = arith.constant 0 : index
    %c0_4 = arith.constant 0 : index
    %3 = vector.load %arg3[%c0_3, %c0_4] : memref<1x384xf32, #tpu.memory_space<vmem>>, vector<1x384xf32>
    %4 = vector.broadcast %3 : vector<1x384xf32> to vector<8x384xf32>
    %5 = arith.addf %2, %4 : vector<8x384xf32>
    %cst_5 = arith.constant 0.000000e+00 : f32
    %6 = vector.broadcast %cst_5 : f32 to vector<8x384xf32>
    %7 = arith.maximumf %5, %6 : vector<8x384xf32>
    %c0_6 = arith.constant 0 : index
    %c0_7 = arith.constant 0 : index
    %8 = vector.load %arg4[%c0_6, %c0_7] : memref<384x256xf32, #tpu.memory_space<vmem>>, vector<384x256xf32>
    %cst_8 = arith.constant dense<0.000000e+00> : vector<8x256xf32>
    %9 = tpu.matmul %7, %8, %cst_8 {dimension_numbers = #tpu.dot_dimension_numbers<[1], [0], [0], [1], [0, 0, 1, 1], [], []>} : vector<8x384xf32>, vector<384x256xf32>, vector<8x256xf32> -> vector<8x256xf32>
    %c0_9 = arith.constant 0 : index
    %c0_10 = arith.constant 0 : index
    %10 = vector.load %arg5[%c0_9, %c0_10] : memref<1x256xf32, #tpu.memory_space<vmem>>, vector<1x256xf32>
    %11 = vector.broadcast %10 : vector<1x256xf32> to vector<8x256xf32>
    %12 = arith.addf %9, %11 : vector<8x256xf32>
    %cst_11 = arith.constant 0.000000e+00 : f32
    %13 = vector.broadcast %cst_11 : f32 to vector<8x256xf32>
    %14 = arith.maximumf %12, %13 : vector<8x256xf32>
    %c0_12 = arith.constant 0 : index
    %c0_13 = arith.constant 0 : index
    %15 = vector.load %arg6[%c0_12, %c0_13] : memref<256x128xf32, #tpu.memory_space<vmem>>, vector<256x128xf32>
    %cst_14 = arith.constant dense<0.000000e+00> : vector<8x128xf32>
    %16 = tpu.matmul %14, %15, %cst_14 {dimension_numbers = #tpu.dot_dimension_numbers<[1], [0], [0], [1], [0, 0, 1, 1], [], []>} : vector<8x256xf32>, vector<256x128xf32>, vector<8x128xf32> -> vector<8x128xf32>
    %17 = vector.extract_strided_slice %16 {offsets = [0, 0], sizes = [8, 8], strides = [1, 1]} : vector<8x128xf32> to vector<8x8xf32>
    %c0_15 = arith.constant 0 : index
    %c0_16 = arith.constant 0 : index
    %18 = vector.load %arg7[%c0_15, %c0_16] : memref<1x8xf32, #tpu.memory_space<vmem>>, vector<1x8xf32>
    %19 = vector.broadcast %18 : vector<1x8xf32> to vector<8x8xf32>
    %20 = arith.addf %17, %19 : vector<8x8xf32>
    %21 = math.tanh %20 : vector<8x8xf32>
    %c0_17 = arith.constant 0 : index
    %c0_18 = arith.constant 0 : index
    %22 = vector.load %arg8[%c0_17, %c0_18] : memref<1x8xf32, #tpu.memory_space<vmem>>, vector<1x8xf32>
    %23 = vector.broadcast %22 : vector<1x8xf32> to vector<8x8xf32>
    %24 = arith.mulf %21, %23 : vector<8x8xf32>
    %c0_19 = arith.constant 0 : index
    %c0_20 = arith.constant 0 : index
    %25 = vector.load %arg9[%c0_19, %c0_20] : memref<8x8xf32, #tpu.memory_space<vmem>>, vector<8x8xf32>
    tpu.vector_store %arg9[%c0_19, %c0_20], %24 {strides = array<i32>} : memref<8x8xf32, #tpu.memory_space<vmem>>, vector<8x8xf32>,
    return
  }
  func.func @transform_0(%arg0: i32) -> (i32, i32) {
    %c0_i32 = arith.constant 0 : i32
    %c0_i32_0 = arith.constant 0 : i32
    return %arg0, %c0_i32 : i32, i32
  }
  func.func @transform_1(%arg0: i32) -> (i32, i32) {
    %c0_i32 = arith.constant 0 : i32
    %c0_i32_0 = arith.constant 0 : i32
    %c0_i32_1 = arith.constant 0 : i32
    return %c0_i32, %c0_i32_0 : i32, i32
  }
  func.func @transform_2(%arg0: i32) -> (i32, i32) {
    %c0_i32 = arith.constant 0 : i32
    %c0_i32_0 = arith.constant 0 : i32
    %c0_i32_1 = arith.constant 0 : i32
    return %c0_i32, %c0_i32_0 : i32, i32
  }
  func.func @transform_3(%arg0: i32) -> (i32, i32) {
    %c0_i32 = arith.constant 0 : i32
    %c0_i32_0 = arith.constant 0 : i32
    %c0_i32_1 = arith.constant 0 : i32
    return %c0_i32, %c0_i32_0 : i32, i32
  }
  func.func @transform_4(%arg0: i32) -> (i32, i32) {
    %c0_i32 = arith.constant 0 : i32
    %c0_i32_0 = arith.constant 0 : i32
    %c0_i32_1 = arith.constant 0 : i32
    return %c0_i32, %c0_i32_0 : i32, i32
  }
  func.func @transform_5(%arg0: i32) -> (i32, i32) {
    %c0_i32 = arith.constant 0 : i32
    %c0_i32_0 = arith.constant 0 : i32
    %c0_i32_1 = arith.constant 0 : i32
    return %c0_i32, %c0_i32_0 : i32, i32
  }
  func.func @transform_6(%arg0: i32) -> (i32, i32) {
    %c0_i32 = arith.constant 0 : i32
    %c0_i32_0 = arith.constant 0 : i32
    %c0_i32_1 = arith.constant 0 : i32
    return %c0_i32, %c0_i32_0 : i32, i32
  }
  func.func @transform_7(%arg0: i32) -> (i32, i32) {
    %c0_i32 = arith.constant 0 : i32
    %c0_i32_0 = arith.constant 0 : i32
    %c0_i32_1 = arith.constant 0 : i32
    return %c0_i32, %c0_i32_0 : i32, i32
  }
  func.func @transform_8(%arg0: i32) -> (i32, i32) {
    %c0_i32 = arith.constant 0 : i32
    %c0_i32_0 = arith.constant 0 : i32
    return %arg0, %c0_i32 : i32, i32
  }
}

</mosaic_0001>

<llo_original>
// kernel: ultra_explorative_actor_forward.1
$region0: #{ultra_explorative_actor_forward.1}
  #allocation0 [shape = 'u32[]', space=smem, size = 0x4, offset = 0x4, fixed_abs, tag = 'smem constant byte address 0x4 - core index']
  #allocation1 [shape = 'u32[144,128]{1,0:T(1,128)}', space=vmem, size = 0x12000, scoped, tag = 'internal scratch']
  %s0 = inlined_call_operand.hbm [shape: f32[8,16], index: 0, kind: input, shape index: {}]
  %s1 = inlined_call_operand.hbm [shape: f32[16,384], index: 1, kind: input, shape index: {}]
  %s2 = inlined_call_operand.vmem [shape: f32[1,384], index: 2, kind: input, shape index: {}]
  %s3 = inlined_call_operand.hbm [shape: f32[384,256], index: 3, kind: input, shape index: {}]
  %s4 = inlined_call_operand.vmem [shape: f32[1,256], index: 4, kind: input, shape index: {}]
  %s5 = inlined_call_operand.hbm [shape: f32[256,128], index: 5, kind: input, shape index: {}]
  %s6 = inlined_call_operand.vmem [shape: f32[1,8], index: 6, kind: input, shape index: {}]
  %s7 = inlined_call_operand.vmem [shape: f32[1,8], index: 7, kind: input, shape index: {}]
  %s8 = inlined_call_operand.vmem [shape: f32[8,8], index: 8, kind: output, shape index: {}]
  %s9 = sld [smem:[#allocation0]]
  $region58: #{ultra_explorative_actor_forward.1} parent=0
    _
  %s11 = ssub.s32 1, %s9
  %s12 = scalar_select 0, %s11, %s9
  $region1: #{ultra_explorative_actor_forward.1} parent=0
    #allocation2 [shape = 'u8[4096]{0}', space=vmem, size = 0x1000, scoped, tag = 'input window, operand 0, single buffered']
    #allocation3 [shape = 's32[1]{0}', space=sflag, size = 0x4, scoped, tag = 'scoped memory for ultra_explorative_actor_forward.1']
    #allocation4 [shape = 'u8[24576]{0}', space=vmem, size = 0x6000, scoped, tag = 'input window, operand 1, single buffered']
    #allocation5 [shape = 's32[1]{0}', space=sflag, size = 0x4, scoped, tag = 'scoped memory for ultra_explorative_actor_forward.1']
    #allocation6 [shape = 'u8[393216]{0}', space=vmem, size = 0x60000, scoped, tag = 'input window, operand 3, single buffered']
    #allocation7 [shape = 'u8[131072]{0}', space=vmem, size = 0x20000, scoped, tag = 'input window, operand 5, single buffered']
    #allocation8 [shape = 's32[1]{0}', space=sflag, size = 0x4, scoped, tag = 'scoped memory for ultra_explorative_actor_forward.1']
    %13 = vsyncpa [#allocation3], 0
    %14 = vsyncpa [#allocation5], 0
    %15 = vsyncpa [#allocation8], 0
    // Predicated region
    $region2: #{ultra_explorative_actor_forward.1} parent=1 // pred_check
      _
    $region3: #{ultra_explorative_actor_forward.1} parent=1 // pred_check_branch
      %17 = sbr.rel (0) target = $region5
    $region4: #{ultra_explorative_actor_forward.1} parent=1 // pred_region
      %s19 = ssub.s32 128, 128
      %20 = vsyncadd [#allocation3], %s19
      %s22 = sshll.u32 [#allocation2], 4
      %s23 = int_to_ptr.vmem [resolvable:$true] %s22
      %25 = dma.hbm_to_vmem [thread:$0]  %s0, 128, %s23, [#allocation3]
    $region5: #{ultra_explorative_actor_forward.1} parent=1 // pred_fallthru
      _
    // Predicated region
    $region6: #{ultra_explorative_actor_forward.1} parent=1 // pred_check
      _
    $region7: #{ultra_explorative_actor_forward.1} parent=1 // pred_check_branch
      %27 = sbr.rel (0) target = $region9
    $region8: #{ultra_explorative_actor_forward.1} parent=1 // pred_region
      %s29 = ssub.s32 768, 768
      %30 = vsyncadd [#allocation5], %s29
      %s31 = sshll.u32 [#allocation4], 4
      %s32 = int_to_ptr.vmem [resolvable:$true] %s31
      %37 = dma.hbm_to_vmem [thread:$0]  %s1, 768, %s32, [#allocation5], 384, 384, 24
    $region9: #{ultra_explorative_actor_forward.1} parent=1 // pred_fallthru
      _
    // Predicated region
    $region10: #{ultra_explorative_actor_forward.1} parent=1 // pred_check
      _
    $region11: #{ultra_explorative_actor_forward.1} parent=1 // pred_check_branch
      %39 = sbr.rel (0) target = $region13
    $region12: #{ultra_explorative_actor_forward.1} parent=1 // pred_region
      _
    $region13: #{ultra_explorative_actor_forward.1} parent=1 // pred_fallthru
      _
    // Predicated region
    $region14: #{ultra_explorative_actor_forward.1} parent=1 // pred_check
      _
    $region15: #{ultra_explorative_actor_forward.1} parent=1 // pred_check_branch
      %41 = sbr.rel (0) target = $region17
    $region16: #{ultra_explorative_actor_forward.1} parent=1 // pred_region
      %s43 = ssub.s32 12288, 12288
      %44 = vsyncadd [#allocation5], %s43
      %s45 = sshll.u32 [#allocation6], 4
      %s46 = int_to_ptr.vmem [resolvable:$true] %s45
      %51 = dma.hbm_to_vmem [thread:$0]  %s3, 12288, %s46, [#allocation5], 256, 256, 16
    $region17: #{ultra_explorative_actor_forward.1} parent=1 // pred_fallthru
      _
    // Predicated region
    $region18: #{ultra_explorative_actor_forward.1} parent=1 // pred_check
      _
    $region19: #{ultra_explorative_actor_forward.1} parent=1 // pred_check_branch
      %53 = sbr.rel (0) target = $region21
    $region20: #{ultra_explorative_actor_forward.1} parent=1 // pred_region
      _
    $region21: #{ultra_explorative_actor_forward.1} parent=1 // pred_fallthru
      _
    // Predicated region
    $region22: #{ultra_explorative_actor_forward.1} parent=1 // pred_check
      _
    $region23: #{ultra_explorative_actor_forward.1} parent=1 // pred_check_branch
      %55 = sbr.rel (0) target = $region25
    $region24: #{ultra_explorative_actor_forward.1} parent=1 // pred_region
      %s57 = ssub.s32 4096, 4096
      %58 = vsyncadd [#allocation8], %s57
      %s59 = sshll.u32 [#allocation7], 4
      %s60 = int_to_ptr.vmem [resolvable:$true] %s59
      %65 = dma.hbm_to_vmem [thread:$0]  %s5, 4096, %s60, [#allocation8], 128, 128, 8
    $region25: #{ultra_explorative_actor_forward.1} parent=1 // pred_fallthru
      _
    // Predicated region
    $region26: #{ultra_explorative_actor_forward.1} parent=1 // pred_check
      _
    $region27: #{ultra_explorative_actor_forward.1} parent=1 // pred_check_branch
      %67 = sbr.rel (0) target = $region29
    $region28: #{ultra_explorative_actor_forward.1} parent=1 // pred_region
      _
    $region29: #{ultra_explorative_actor_forward.1} parent=1 // pred_fallthru
      _
    // Predicated region
    $region30: #{ultra_explorative_actor_forward.1} parent=1 // pred_check
      _
    $region31: #{ultra_explorative_actor_forward.1} parent=1 // pred_check_branch
      %69 = sbr.rel (0) target = $region33
    $region32: #{ultra_explorative_actor_forward.1} parent=1 // pred_region
      _
    $region33: #{ultra_explorative_actor_forward.1} parent=1 // pred_fallthru
      _
    // Predicated region
    $region34: #{ultra_explorative_actor_forward.1} parent=1 // pred_check
      _
    $region35: #{ultra_explorative_actor_forward.1} parent=1 // pred_check_branch
      %71 = sbr.rel (0) target = $region37
    $region36: #{ultra_explorative_actor_forward.1} parent=1 // pred_region
      %72 = dma.done [#allocation3], 128
    $region37: #{ultra_explorative_actor_forward.1} parent=1 // pred_fallthru
      _
    // Predicated region
    $region38: #{ultra_explorative_actor_forward.1} parent=1 // pred_check
      _
    $region39: #{ultra_explorative_actor_forward.1} parent=1 // pred_check_branch
      %74 = sbr.rel (0) target = $region41
    $region40: #{ultra_explorative_actor_forward.1} parent=1 // pred_region
      %75 = dma.done [#allocation5], 768
    $region41: #{ultra_explorative_actor_forward.1} parent=1 // pred_fallthru
      _
    // Predicated region
    $region42: #{ultra_explorative_actor_forward.1} parent=1 // pred_check
      _
    $region43: #{ultra_explorative_actor_forward.1} parent=1 // pred_check_branch
      %77 = sbr.rel (0) target = $region45
    $region44: #{ultra_explorative_actor_forward.1} parent=1 // pred_region
      %78 = dma.done [#allocation5], 12288
    $region45: #{ultra_explorative_actor_forward.1} parent=1 // pred_fallthru
      _
    // Predicated region
    $region46: #{ultra_explorative_actor_forward.1} parent=1 // pred_check
      _
    $region47: #{ultra_explorative_actor_forward.1} parent=1 // pred_check_branch
      %80 = sbr.rel (0) target = $region49
    $region48: #{ultra_explorative_actor_forward.1} parent=1 // pred_region
      %81 = dma.done [#allocation8], 4096
    $region49: #{ultra_explorative_actor_forward.1} parent=1 // pred_fallthru
      _
    %v82 = vld [vmem:[#allocation2] sm:$0xff]
    %v83 = vld [vmem:[#allocation4] sm:$0xff]
    %v84 = vld [vmem:[#allocation4 + $0x8] sm:$0xff]
    %v85 = vld [vmem:[#allocation4 + $0x10] sm:$0xff]
    %v86 = vld [vmem:[#allocation4 + $0x18] sm:$0xff]
    %v87 = vld [vmem:[#allocation4 + $0x20] sm:$0xff]
    %v88 = vld [vmem:[#allocation4 + $0x28] sm:$0xff]
    %v89 = vld [vmem:[%s2] sm:$0x7]
    %v91 = vlaneseq
    %v92 = vshrl.u32 %v91, 7
    %v93 = vsub.s32 0, %v92
    %v94 = vrot.slane %v89, %v93
    %v95 = vlaneseq
    %v96 = vshrl.u32 %v95, 7
    %v97 = vsub.s32 1, %v96
    %v98 = vrot.slane %v89, %v97
    %v99 = vlaneseq
    %v100 = vshrl.u32 %v99, 7
    %v101 = vsub.s32 2, %v100
    %v102 = vrot.slane %v89, %v101
    %vm106 = vcmask 130048
    %v108 = vsel %vm106, %v82, 0
    %110 = vmatprep.subr.mxu0 %v84
    %111 = vmatpush1.msra.mxu0 %v83
    %112 = vmatprep.subr.mxu0 %v87
    %113 = vmatpush1.msra.mxu0 %v86
    %114 = vmatprep.subr.mxu0 0.0
    %115 = vmatpush1.msra.mxu0 0.0
    %116 = vmatprep.subr.mxu0 0.0
    %117 = vmatpush1.msra.mxu0 0.0
    %118 = vmatprep.subr.mxu0 0.0
    %119 = vmatpush1.msra.mxu0 0.0
    %120 = vmatprep.subr.mxu0 0.0
    %121 = vmatpush1.msra.mxu0 0.0
    %122 = vmatprep.subr.mxu0 0.0
    %123 = vmatpush1.msra.mxu0 0.0
    %124 = vmatprep.subr.mxu0 0.0
    %125 = vmatpush1.msra.mxu0 0.0
    %126 = vmatprep.subr.mxu0 0.0
    %127 = vmatpush1.msra.mxu0 0.0
    %128 = vmatprep.subr.mxu0 0.0
    %129 = vmatpush1.msra.mxu0 0.0
    %130 = vmatprep.subr.mxu0 0.0
    %131 = vmatpush1.msra.mxu0 0.0
    %132 = vmatprep.subr.mxu0 0.0
    %133 = vmatpush1.msra.mxu0 0.0
    %134 = vmatprep.subr.mxu0 0.0
    %135 = vmatpush1.msra.mxu0 0.0
    %136 = vmatprep.subr.mxu0 0.0
    %137 = vmatpush1.msra.mxu0 0.0
    %138 = vmatprep.subr.mxu0 0.0
    %139 = vmatpush1.msra.mxu0 0.0
    %140 = vmatprep.subr.mxu0 0.0
    %141 = vmatpush1.msra.mxu0 0.0
    %142 = vmatprep.subr.mxu0 0.0
    %143 = vmatpush1.msra.mxu0 0.0
    %144 = vmatprep.subr.mxu0 0.0
    %145 = vmatpush1.msra.mxu0 0.0
    %146 = vmatprep.subr.mxu0 0.0
    %147 = vmatpush1.msra.mxu0 0.0
    %148 = vmatprep.subr.mxu0 0.0
    %149 = vmatpush1.msra.mxu0 0.0
    %150 = vmatprep.subr.mxu0 0.0
    %151 = vmatpush1.msra.mxu0 0.0
    %152 = vmatprep.subr.mxu0 0.0
    %153 = vmatpush1.msra.mxu0 0.0
    %154 = vmatprep.subr.mxu0 0.0
    %155 = vmatpush1.msra.mxu0 0.0
    %156 = vmatprep.subr.mxu0 0.0
    %157 = vmatpush1.msra.mxu0 0.0
    %158 = vmatprep.subr.mxu0 0.0
    %159 = vmatpush1.msra.mxu0 0.0
    %160 = vmatprep.subr.mxu0 0.0
    %161 = vmatpush1.msra.mxu0 0.0
    %162 = vmatprep.subr.mxu0 0.0
    %163 = vmatpush1.msra.mxu0 0.0
    %164 = vmatprep.subr.mxu0 0.0
    %165 = vmatpush1.msra.mxu0 0.0
    %166 = vmatprep.subr.mxu0 0.0
    %167 = vmatpush1.msra.mxu0 0.0
    %168 = vmatprep.subr.mxu0 0.0
    %169 = vmatpush1.msra.mxu0 0.0
    %170 = vmatprep.subr.mxu0 0.0
    %171 = vmatpush1.msra.mxu0 0.0
    %172 = vmatprep.subr.mxu0 0.0
    %173 = vmatpush1.msra.mxu0 0.0
    %174 = vmatprep.mubr.f32.mxu0 0.0
    %175 = vmatmul.mubr.f32.gmra.mrb[0].mxu0 %v108
    %v176 = vpop.f32.mrb[0].mxu0
    %v177 = vadd.f32 %v94, %v176
    %v178 = vpop.f32.mrb[0].mxu0
    %v179 = vadd.f32 %v98, %v178
    %180 = vdwg.mxu0
    %181 = vmatprep.subr.mxu0 0.0
    %182 = vmatpush1.msra.mxu0 %v85
    %183 = vmatprep.subr.mxu0 0.0
    %184 = vmatpush1.msra.mxu0 %v88
    %185 = vmatprep.subr.mxu0 0.0
    %186 = vmatpush1.msra.mxu0 0.0
    %187 = vmatprep.subr.mxu0 0.0
    %188 = vmatpush1.msra.mxu0 0.0
    %189 = vmatprep.subr.mxu0 0.0
    %190 = vmatpush1.msra.mxu0 0.0
    %191 = vmatprep.subr.mxu0 0.0
    %192 = vmatpush1.msra.mxu0 0.0
    %193 = vmatprep.subr.mxu0 0.0
    %194 = vmatpush1.msra.mxu0 0.0
    %195 = vmatprep.subr.mxu0 0.0
    %196 = vmatpush1.msra.mxu0 0.0
    %197 = vmatprep.subr.mxu0 0.0
    %198 = vmatpush1.msra.mxu0 0.0
    %199 = vmatprep.subr.mxu0 0.0
    %200 = vmatpush1.msra.mxu0 0.0
    %201 = vmatprep.subr.mxu0 0.0
    %202 = vmatpush1.msra.mxu0 0.0
    %203 = vmatprep.subr.mxu0 0.0
    %204 = vmatpush1.msra.mxu0 0.0
    %205 = vmatprep.subr.mxu0 0.0
    %206 = vmatpush1.msra.mxu0 0.0
    %207 = vmatprep.subr.mxu0 0.0
    %208 = vmatpush1.msra.mxu0 0.0
    %209 = vmatprep.subr.mxu0 0.0
    %210 = vmatpush1.msra.mxu0 0.0
    %211 = vmatprep.subr.mxu0 0.0
    %212 = vmatpush1.msra.mxu0 0.0
    %213 = vmatprep.subr.mxu0 0.0
    %214 = vmatpush1.msra.mxu0 0.0
    %215 = vmatprep.subr.mxu0 0.0
    %216 = vmatpush1.msra.mxu0 0.0
    %217 = vmatprep.subr.mxu0 0.0
    %218 = vmatpush1.msra.mxu0 0.0
    %219 = vmatprep.subr.mxu0 0.0
    %220 = vmatpush1.msra.mxu0 0.0
    %221 = vmatprep.subr.mxu0 0.0
    %222 = vmatpush1.msra.mxu0 0.0
    %223 = vmatprep.subr.mxu0 0.0
    %224 = vmatpush1.msra.mxu0 0.0
    %225 = vmatprep.subr.mxu0 0.0
    %226 = vmatpush1.msra.mxu0 0.0
    %227 = vmatprep.subr.mxu0 0.0
    %228 = vmatpush1.msra.mxu0 0.0
    %229 = vmatprep.subr.mxu0 0.0
    %230 = vmatpush1.msra.mxu0 0.0
    %231 = vmatprep.subr.mxu0 0.0
    %232 = vmatpush1.msra.mxu0 0.0
    %233 = vmatprep.subr.mxu0 0.0
    %234 = vmatpush1.msra.mxu0 0.0
    %235 = vmatprep.subr.mxu0 0.0
    %236 = vmatpush1.msra.mxu0 0.0
    %237 = vmatprep.subr.mxu0 0.0
    %238 = vmatpush1.msra.mxu0 0.0
    %239 = vmatprep.subr.mxu0 0.0
    %240 = vmatpush1.msra.mxu0 0.0
    %241 = vmatprep.subr.mxu0 0.0
    %242 = vmatpush1.msra.mxu0 0.0
    %243 = vmatprep.subr.mxu0 0.0
    %244 = vmatpush1.msra.mxu0 0.0
    %245 = vmatprep.mubr.f32.mxu0 0.0
    %246 = vmatmul.mubr.f32.gmra.mrb[0].mxu0 %v108
    %v247 = vpop.f32.mrb[0].mxu0
    %v248 = vadd.f32 %v102, %v247
    %v249 = vpop.f32.mrb[0].mxu0
    %250 = vdwg.mxu0
    %v251 = vmax.f32 %v177, 0.0
    %v252 = vmax.f32 %v179, 0.0
    %v253 = vmax.f32 %v248, 0.0
    %v254 = vld [vmem:[#allocation6] sm:$0xff]
    %v255 = vld [vmem:[#allocation6 + $0x8] sm:$0xff]
    %v256 = vld [vmem:[#allocation6 + $0x10] sm:$0xff]
    %v257 = vld [vmem:[#allocation6 + $0x18] sm:$0xff]
    %v258 = vld [vmem:[#allocation6 + $0x20] sm:$0xff]
    %v259 = vld [vmem:[#allocation6 + $0x28] sm:$0xff]
    %v260 = vld [vmem:[#allocation6 + $0x30] sm:$0xff]
    %v261 = vld [vmem:[#allocation6 + $0x38] sm:$0xff]
    %v262 = vld [vmem:[#allocation6 + $0x40] sm:$0xff]
    %v263 = vld [vmem:[#allocation6 + $0x48] sm:$0xff]
    %v264 = vld [vmem:[#allocation6 + $0x50] sm:$0xff]
    %v265 = vld [vmem:[#allocation6 + $0x58] sm:$0xff]
    %v266 = vld [vmem:[#allocation6 + $0x60] sm:$0xff]
    %v267 = vld [vmem:[#allocation6 + $0x68] sm:$0xff]
    %v268 = vld [vmem:[#allocation6 + $0x70] sm:$0xff]
    %v269 = vld [vmem:[#allocation6 + $0x78] sm:$0xff]
    %v270 = vld [vmem:[#allocation6 + $0x80] sm:$0xff]
    %v271 = vld [vmem:[#allocation6 + $0x88] sm:$0xff]
    %v272 = vld [vmem:[#allocation6 + $0x90] sm:$0xff]
    %v273 = vld [vmem:[#allocation6 + $0x98] sm:$0xff]
    %v274 = vld [vmem:[#allocation6 + $0xa0] sm:$0xff]
    %v275 = vld [vmem:[#allocation6 + $0xa8] sm:$0xff]
    %v276 = vld [vmem:[#allocation6 + $0xb0] sm:$0xff]
    %v277 = vld [vmem:[#allocation6 + $0xb8] sm:$0xff]
    %v278 = vld [vmem:[#allocation6 + $0xc0] sm:$0xff]
    %v279 = vld [vmem:[#allocation6 + $0xc8] sm:$0xff]
    %v280 = vld [vmem:[#allocation6 + $0xd0] sm:$0xff]
    %v281 = vld [vmem:[#allocation6 + $0xd8] sm:$0xff]
    %v282 = vld [vmem:[#allocation6 + $0xe0] sm:$0xff]
    %v283 = vld [vmem:[#allocation6 + $0xe8] sm:$0xff]
    %v284 = vld [vmem:[#allocation6 + $0xf0] sm:$0xff]
    %v285 = vld [vmem:[#allocation6 + $0xf8] sm:$0xff]
    %v286 = vld [vmem:[#allocation6 + $0x100] sm:$0xff]
    %v287 = vld [vmem:[#allocation6 + $0x108] sm:$0xff]
    %v288 = vld [vmem:[#allocation6 + $0x110] sm:$0xff]
    %v289 = vld [vmem:[#allocation6 + $0x118] sm:$0xff]
    %v290 = vld [vmem:[#allocation6 + $0x120] sm:$0xff]
    %v291 = vld [vmem:[#allocation6 + $0x128] sm:$0xff]
    %v292 = vld [vmem:[#allocation6 + $0x130] sm:$0xff]
    %v293 = vld [vmem:[#allocation6 + $0x138] sm:$0xff]
    %v294 = vld [vmem:[#allocation6 + $0x140] sm:$0xff]
    %v295 = vld [vmem:[#allocation6 + $0x148] sm:$0xff]
    %v296 = vld [vmem:[#allocation6 + $0x150] sm:$0xff]
    %v297 = vld [vmem:[#allocation6 + $0x158] sm:$0xff]
    %v298 = vld [vmem:[#allocation6 + $0x160] sm:$0xff]
    %v299 = vld [vmem:[#allocation6 + $0x168] sm:$0xff]
    %v300 = vld [vmem:[#allocation6 + $0x170] sm:$0xff]
    %v301 = vld [vmem:[#allocation6 + $0x178] sm:$0xff]
    %v302 = vld [vmem:[#allocation6 + $0x180] sm:$0xff]
    %v303 = vld [vmem:[#allocation6 + $0x188] sm:$0xff]
    %v304 = vld [vmem:[#allocation6 + $0x190] sm:$0xff]
    %v305 = vld [vmem:[#allocation6 + $0x198] sm:$0xff]
    %v306 = vld [vmem:[#allocation6 + $0x1a0] sm:$0xff]
    %v307 = vld [vmem:[#allocation6 + $0x1a8] sm:$0xff]
    %v308 = vld [vmem:[#allocation6 + $0x1b0] sm:$0xff]
    %v309 = vld [vmem:[#allocation6 + $0x1b8] sm:$0xff]
    %v310 = vld [vmem:[#allocation6 + $0x1c0] sm:$0xff]
    %v311 = vld [vmem:[#allocation6 + $0x1c8] sm:$0xff]
    %v312 = vld [vmem:[#allocation6 + $0x1d0] sm:$0xff]
    %v313 = vld [vmem:[#allocation6 + $0x1d8] sm:$0xff]
    %v314 = vld [vmem:[#allocation6 + $0x1e0] sm:$0xff]
    %v315 = vld [vmem:[#allocation6 + $0x1e8] sm:$0xff]
    %v316 = vld [vmem:[#allocation6 + $0x1f0] sm:$0xff]
    %v317 = vld [vmem:[#allocation6 + $0x1f8] sm:$0xff]
    %v318 = vld [vmem:[#allocation6 + $0x200] sm:$0xff]
    %v319 = vld [vmem:[#allocation6 + $0x208] sm:$0xff]
    %v320 = vld [vmem:[#allocation6 + $0x210] sm:$0xff]
    %v321 = vld [vmem:[#allocation6 + $0x218] sm:$0xff]
    %v322 = vld [vmem:[#allocation6 + $0x220] sm:$0xff]
    %v323 = vld [vmem:[#allocation6 + $0x228] sm:$0xff]
    %v324 = vld [vmem:[#allocation6 + $0x230] sm:$0xff]
    %v325 = vld [vmem:[#allocation6 + $0x238] sm:$0xff]
    %v326 = vld [vmem:[#allocation6 + $0x240] sm:$0xff]
    %v327 = vld [vmem:[#allocation6 + $0x248] sm:$0xff]
    %v328 = vld [vmem:[#allocation6 + $0x250] sm:$0xff]
    %v329 = vld [vmem:[#allocation6 + $0x258] sm:$0xff]
    %v330 = vld [vmem:[#allocation6 + $0x260] sm:$0xff]
    %v331 = vld [vmem:[#allocation6 + $0x268] sm:$0xff]
    %v332 = vld [vmem:[#allocation6 + $0x270] sm:$0xff]
    %v333 = vld [vmem:[#allocation6 + $0x278] sm:$0xff]
    %v334 = vld [vmem:[#allocation6 + $0x280] sm:$0xff]
    %v335 = vld [vmem:[#allocation6 + $0x288] sm:$0xff]
    %v336 = vld [vmem:[#allocation6 + $0x290] sm:$0xff]
    %v337 = vld [vmem:[#allocation6 + $0x298] sm:$0xff]
    %v338 = vld [vmem:[#allocation6 + $0x2a0] sm:$0xff]
    %v339 = vld [vmem:[#allocation6 + $0x2a8] sm:$0xff]
    %v340 = vld [vmem:[#allocation6 + $0x2b0] sm:$0xff]
    %v341 = vld [vmem:[#allocation6 + $0x2b8] sm:$0xff]
    %v342 = vld [vmem:[#allocation6 + $0x2c0] sm:$0xff]
    %v343 = vld [vmem:[#allocation6 + $0x2c8] sm:$0xff]
    %v344 = vld [vmem:[#allocation6 + $0x2d0] sm:$0xff]
    %v345 = vld [vmem:[#allocation6 + $0x2d8] sm:$0xff]
    %v346 = vld [vmem:[#allocation6 + $0x2e0] sm:$0xff]
    %v347 = vld [vmem:[#allocation6 + $0x2e8] sm:$0xff]
    %v348 = vld [vmem:[#allocation6 + $0x2f0] sm:$0xff]
    %v349 = vld [vmem:[#allocation6 + $0x2f8] sm:$0xff]
    %v350 = vld [vmem:[%s4] sm:$0x3]
    %v352 = vlaneseq
    %v353 = vshrl.u32 %v352, 7
    %v354 = vsub.s32 0, %v353
    %v355 = vrot.slane %v350, %v354
    %v356 = vlaneseq
    %v357 = vshrl.u32 %v356, 7
    %v358 = vsub.s32 1, %v357
    %v359 = vrot.slane %v350, %v358
    %362 = vmatprep.subr.mxu0 %v255
    %363 = vmatpush1.msra.mxu0 %v254
    %364 = vmatprep.subr.mxu0 %v257
    %365 = vmatpush1.msra.mxu0 %v256
    %366 = vmatprep.subr.mxu0 %v259
    %367 = vmatpush1.msra.mxu0 %v258
    %368 = vmatprep.subr.mxu0 %v261
    %369 = vmatpush1.msra.mxu0 %v260
    %370 = vmatprep.subr.mxu0 %v263
    %371 = vmatpush1.msra.mxu0 %v262
    %372 = vmatprep.subr.mxu0 %v265
    %373 = vmatpush1.msra.mxu0 %v264
    %374 = vmatprep.subr.mxu0 %v267
    %375 = vmatpush1.msra.mxu0 %v266
    %376 = vmatprep.subr.mxu0 %v269
    %377 = vmatpush1.msra.mxu0 %v268
    %378 = vmatprep.subr.mxu0 %v271
    %379 = vmatpush1.msra.mxu0 %v270
    %380 = vmatprep.subr.mxu0 %v273
    %381 = vmatpush1.msra.mxu0 %v272
    %382 = vmatprep.subr.mxu0 %v275
    %383 = vmatpush1.msra.mxu0 %v274
    %384 = vmatprep.subr.mxu0 %v277
    %385 = vmatpush1.msra.mxu0 %v276
    %386 = vmatprep.subr.mxu0 %v279
    %387 = vmatpush1.msra.mxu0 %v278
    %388 = vmatprep.subr.mxu0 %v281
    %389 = vmatpush1.msra.mxu0 %v280
    %390 = vmatprep.subr.mxu0 %v283
    %391 = vmatpush1.msra.mxu0 %v282
    %392 = vmatprep.subr.mxu0 %v285
    %393 = vmatpush1.msra.mxu0 %v284
    %394 = vmatprep.subr.mxu0 %v287
    %395 = vmatpush1.msra.mxu0 %v286
    %396 = vmatprep.subr.mxu0 %v289
    %397 = vmatpush1.msra.mxu0 %v288
    %398 = vmatprep.subr.mxu0 %v291
    %399 = vmatpush1.msra.mxu0 %v290
    %400 = vmatprep.subr.mxu0 %v293
    %401 = vmatpush1.msra.mxu0 %v292
    %402 = vmatprep.subr.mxu0 %v295
    %403 = vmatpush1.msra.mxu0 %v294
    %404 = vmatprep.subr.mxu0 %v297
    %405 = vmatpush1.msra.mxu0 %v296
    %406 = vmatprep.subr.mxu0 %v299
    %407 = vmatpush1.msra.mxu0 %v298
    %408 = vmatprep.subr.mxu0 %v301
    %409 = vmatpush1.msra.mxu0 %v300
    %410 = vmatprep.subr.mxu0 %v303
    %411 = vmatpush1.msra.mxu0 %v302
    %412 = vmatprep.subr.mxu0 %v305
    %413 = vmatpush1.msra.mxu0 %v304
    %414 = vmatprep.subr.mxu0 %v307
    %415 = vmatpush1.msra.mxu0 %v306
    %416 = vmatprep.subr.mxu0 %v309
    %417 = vmatpush1.msra.mxu0 %v308
    %418 = vmatprep.subr.mxu0 %v311
    %419 = vmatpush1.msra.mxu0 %v310
    %420 = vmatprep.subr.mxu0 %v313
    %421 = vmatpush1.msra.mxu0 %v312
    %422 = vmatprep.subr.mxu0 %v315
    %423 = vmatpush1.msra.mxu0 %v314
    %424 = vmatprep.subr.mxu0 %v317
    %425 = vmatpush1.msra.mxu0 %v316
    %426 = vmatprep.mubr.f32.mxu0 %v252
    %427 = vmatmul.mubr.f32.gmra.mrb[0].mxu0 %v251
    %v428 = vpop.f32.mrb[0].mxu0
    %v429 = vadd.f32 %v355, %v428
    %v430 = vpop.f32.mrb[0].mxu0
    %v431 = vadd.f32 %v359, %v430
    %432 = vdwg.mxu0
    %433 = vmatprep.subr.mxu0 %v319
    %434 = vmatpush1.msra.mxu0 %v318
    %435 = vmatprep.subr.mxu0 %v321
    %436 = vmatpush1.msra.mxu0 %v320
    %437 = vmatprep.subr.mxu0 %v323
    %438 = vmatpush1.msra.mxu0 %v322
    %439 = vmatprep.subr.mxu0 %v325
    %440 = vmatpush1.msra.mxu0 %v324
    %441 = vmatprep.subr.mxu0 %v327
    %442 = vmatpush1.msra.mxu0 %v326
    %443 = vmatprep.subr.mxu0 %v329
    %444 = vmatpush1.msra.mxu0 %v328
    %445 = vmatprep.subr.mxu0 %v331
    %446 = vmatpush1.msra.mxu0 %v330
    %447 = vmatprep.subr.mxu0 %v333
    %448 = vmatpush1.msra.mxu0 %v332
    %449 = vmatprep.subr.mxu0 %v335
    %450 = vmatpush1.msra.mxu0 %v334
    %451 = vmatprep.subr.mxu0 %v337
    %452 = vmatpush1.msra.mxu0 %v336
    %453 = vmatprep.subr.mxu0 %v339
    %454 = vmatpush1.msra.mxu0 %v338
    %455 = vmatprep.subr.mxu0 %v341
    %456 = vmatpush1.msra.mxu0 %v340
    %457 = vmatprep.subr.mxu0 %v343
    %458 = vmatpush1.msra.mxu0 %v342
    %459 = vmatprep.subr.mxu0 %v345
    %460 = vmatpush1.msra.mxu0 %v344
    %461 = vmatprep.subr.mxu0 %v347
    %462 = vmatpush1.msra.mxu0 %v346
    %463 = vmatprep.subr.mxu0 %v349
    %464 = vmatpush1.msra.mxu0 %v348
    %465 = vmatprep.subr.mxu0 0.0
    %466 = vmatpush1.msra.mxu0 0.0
    %467 = vmatprep.subr.mxu0 0.0
    %468 = vmatpush1.msra.mxu0 0.0
    %469 = vmatprep.subr.mxu0 0.0
    %470 = vmatpush1.msra.mxu0 0.0
    %471 = vmatprep.subr.mxu0 0.0
    %472 = vmatpush1.msra.mxu0 0.0
    %473 = vmatprep.subr.mxu0 0.0
    %474 = vmatpush1.msra.mxu0 0.0
    %475 = vmatprep.subr.mxu0 0.0
    %476 = vmatpush1.msra.mxu0 0.0
    %477 = vmatprep.subr.mxu0 0.0
    %478 = vmatpush1.msra.mxu0 0.0
    %479 = vmatprep.subr.mxu0 0.0
    %480 = vmatpush1.msra.mxu0 0.0
    %481 = vmatprep.subr.mxu0 0.0
    %482 = vmatpush1.msra.mxu0 0.0
    %483 = vmatprep.subr.mxu0 0.0
    %484 = vmatpush1.msra.mxu0 0.0
    %485 = vmatprep.subr.mxu0 0.0
    %486 = vmatpush1.msra.mxu0 0.0
    %487 = vmatprep.subr.mxu0 0.0
    %488 = vmatpush1.msra.mxu0 0.0
    %489 = vmatprep.subr.mxu0 0.0
    %490 = vmatpush1.msra.mxu0 0.0
    %491 = vmatprep.subr.mxu0 0.0
    %492 = vmatpush1.msra.mxu0 0.0
    %493 = vmatprep.subr.mxu0 0.0
    %494 = vmatpush1.msra.mxu0 0.0
    %495 = vmatprep.subr.mxu0 0.0
    %496 = vmatpush1.msra.mxu0 0.0
    %497 = vmatprep.mubr.f32.mxu0 0.0
    %498 = vmatmul.mubr.f32.gmra.mrb[0].mxu0 %v253
    %v499 = vpop.f32.mrb[0].mxu0
    %v500 = vadd.f32 %v429, %v499
    %v501 = vpop.f32.mrb[0].mxu0
    %v502 = vadd.f32 %v431, %v501
    %503 = vdwg.mxu0
    %v504 = vmax.f32 %v500, 0.0
    %v505 = vmax.f32 %v502, 0.0
    %v506 = vld [vmem:[#allocation7] sm:$0xff]
    %v507 = vld [vmem:[#allocation7 + $0x8] sm:$0xff]
    %v508 = vld [vmem:[#allocation7 + $0x10] sm:$0xff]
    %v509 = vld [vmem:[#allocation7 + $0x18] sm:$0xff]
    %v510 = vld [vmem:[#allocation7 + $0x20] sm:$0xff]
    %v511 = vld [vmem:[#allocation7 + $0x28] sm:$0xff]
    %v512 = vld [vmem:[#allocation7 + $0x30] sm:$0xff]
    %v513 = vld [vmem:[#allocation7 + $0x38] sm:$0xff]
    %v514 = vld [vmem:[#allocation7 + $0x40] sm:$0xff]
    %v515 = vld [vmem:[#allocation7 + $0x48] sm:$0xff]
    %v516 = vld [vmem:[#allocation7 + $0x50] sm:$0xff]
    %v517 = vld [vmem:[#allocation7 + $0x58] sm:$0xff]
    %v518 = vld [vmem:[#allocation7 + $0x60] sm:$0xff]
    %v519 = vld [vmem:[#allocation7 + $0x68] sm:$0xff]
    %v520 = vld [vmem:[#allocation7 + $0x70] sm:$0xff]
    %v521 = vld [vmem:[#allocation7 + $0x78] sm:$0xff]
    %v522 = vld [vmem:[#allocation7 + $0x80] sm:$0xff]
    %v523 = vld [vmem:[#allocation7 + $0x88] sm:$0xff]
    %v524 = vld [vmem:[#allocation7 + $0x90] sm:$0xff]
    %v525 = vld [vmem:[#allocation7 + $0x98] sm:$0xff]
    %v526 = vld [vmem:[#allocation7 + $0xa0] sm:$0xff]
    %v527 = vld [vmem:[#allocation7 + $0xa8] sm:$0xff]
    %v528 = vld [vmem:[#allocation7 + $0xb0] sm:$0xff]
    %v529 = vld [vmem:[#allocation7 + $0xb8] sm:$0xff]
    %v530 = vld [vmem:[#allocation7 + $0xc0] sm:$0xff]
    %v531 = vld [vmem:[#allocation7 + $0xc8] sm:$0xff]
    %v532 = vld [vmem:[#allocation7 + $0xd0] sm:$0xff]
    %v533 = vld [vmem:[#allocation7 + $0xd8] sm:$0xff]
    %v534 = vld [vmem:[#allocation7 + $0xe0] sm:$0xff]
    %v535 = vld [vmem:[#allocation7 + $0xe8] sm:$0xff]
    %v536 = vld [vmem:[#allocation7 + $0xf0] sm:$0xff]
    %v537 = vld [vmem:[#allocation7 + $0xf8] sm:$0xff]
    %538 = vmatprep.subr.mxu0 0.0
    %539 = vmatpush1.msra.mxu0 %v506
    %540 = vmatprep.subr.mxu0 0.0
    %541 = vmatpush1.msra.mxu0 %v507
    %542 = vmatprep.subr.mxu0 0.0
    %543 = vmatpush1.msra.mxu0 %v508
    %544 = vmatprep.subr.mxu0 0.0
    %545 = vmatpush1.msra.mxu0 %v509
    %546 = vmatprep.subr.mxu0 0.0
    %547 = vmatpush1.msra.mxu0 %v510
    %548 = vmatprep.subr.mxu0 0.0
    %549 = vmatpush1.msra.mxu0 %v511
    %550 = vmatprep.subr.mxu0 0.0
    %551 = vmatpush1.msra.mxu0 %v512
    %552 = vmatprep.subr.mxu0 0.0
    %553 = vmatpush1.msra.mxu0 %v513
    %554 = vmatprep.subr.mxu0 0.0
    %555 = vmatpush1.msra.mxu0 %v514
    %556 = vmatprep.subr.mxu0 0.0
    %557 = vmatpush1.msra.mxu0 %v515
    %558 = vmatprep.subr.mxu0 0.0
    %559 = vmatpush1.msra.mxu0 %v516
    %560 = vmatprep.subr.mxu0 0.0
    %561 = vmatpush1.msra.mxu0 %v517
    %562 = vmatprep.subr.mxu0 0.0
    %563 = vmatpush1.msra.mxu0 %v518
    %564 = vmatprep.subr.mxu0 0.0
    %565 = vmatpush1.msra.mxu0 %v519
    %566 = vmatprep.subr.mxu0 0.0
    %567 = vmatpush1.msra.mxu0 %v520
    %568 = vmatprep.subr.mxu0 0.0
    %569 = vmatpush1.msra.mxu0 %v521
    %570 = vmatprep.subr.mxu0 0.0
    %571 = vmatpush1.msra.mxu0 %v522
    %572 = vmatprep.subr.mxu0 0.0
    %573 = vmatpush1.msra.mxu0 %v523
    %574 = vmatprep.subr.mxu0 0.0
    %575 = vmatpush1.msra.mxu0 %v524
    %576 = vmatprep.subr.mxu0 0.0
    %577 = vmatpush1.msra.mxu0 %v525
    %578 = vmatprep.subr.mxu0 0.0
    %579 = vmatpush1.msra.mxu0 %v526
    %580 = vmatprep.subr.mxu0 0.0
    %581 = vmatpush1.msra.mxu0 %v527
    %582 = vmatprep.subr.mxu0 0.0
    %583 = vmatpush1.msra.mxu0 %v528
    %584 = vmatprep.subr.mxu0 0.0
    %585 = vmatpush1.msra.mxu0 %v529
    %586 = vmatprep.subr.mxu0 0.0
    %587 = vmatpush1.msra.mxu0 %v530
    %588 = vmatprep.subr.mxu0 0.0
    %589 = vmatpush1.msra.mxu0 %v531
    %590 = vmatprep.subr.mxu0 0.0
    %591 = vmatpush1.msra.mxu0 %v532
    %592 = vmatprep.subr.mxu0 0.0
    %593 = vmatpush1.msra.mxu0 %v533
    %594 = vmatprep.subr.mxu0 0.0
    %595 = vmatpush1.msra.mxu0 %v534
    %596 = vmatprep.subr.mxu0 0.0
    %597 = vmatpush1.msra.mxu0 %v535
    %598 = vmatprep.subr.mxu0 0.0
    %599 = vmatpush1.msra.mxu0 %v536
    %600 = vmatprep.subr.mxu0 0.0
    %601 = vmatpush1.msra.mxu0 %v537
    %602 = vmatprep.mubr.f32.mxu0 %v505
    %603 = vmatmul.mubr.f32.gmra.mrb[0].mxu0 %v504
    %v604 = vpop.f32.mrb[0].mxu0
    %v605 = vadd.f32 0.0, %v604
    %v606 = vpop.f32.mrb[0].mxu0
    %607 = vdwg.mxu0
    %v608 = vld [vmem:[%s6] sm:$0x1]
    %v610 = vlaneseq
    %v611 = vshrl.u32 %v610, 7
    %v612 = vsub.s32 0, %v611
    %v613 = vrot.slane %v608, %v612
    %v615 = vadd.f32 %v605, %v613
    %v616 = vtanh.pop %v615
    %v617 = vld [vmem:[%s7] sm:$0x1]
    %v619 = vlaneseq
    %v620 = vshrl.u32 %v619, 7
    %v621 = vsub.s32 0, %v620
    %v622 = vrot.slane %v617, %v621
    %v624 = vmul.f32 %v616, %v622
    %vm625 = vcmask 64512
    %626 = vst.msk [vmem:[%s8] sm:$0xff] %vm625, %v624
    // Predicated region
    $region50: #{ultra_explorative_actor_forward.1} parent=1 // pred_check
      _
    $region51: #{ultra_explorative_actor_forward.1} parent=1 // pred_check_branch
      %628 = sbr.rel (0) target = $region53
    $region52: #{ultra_explorative_actor_forward.1} parent=1 // pred_region
      _
    $region53: #{ultra_explorative_actor_forward.1} parent=1 // pred_fallthru
      _
    // Predicated region
    $region54: #{ultra_explorative_actor_forward.1} parent=1 // pred_check
      _
    $region55: #{ultra_explorative_actor_forward.1} parent=1 // pred_check_branch
      %630 = sbr.rel (0) target = $region57
    $region56: #{ultra_explorative_actor_forward.1} parent=1 // pred_region
      _
    $region57: #{ultra_explorative_actor_forward.1} parent=1 // pred_fallthru
      _
    %631 = vsyncpa [#allocation3], 1
    %632 = vsyncpa [#allocation5], 1
    %633 = vsyncpa [#allocation8], 1

</llo_original>
